<compile_context>
chip_gen: v7x
topology: tpu7x:2x2x1
jax: 0.10.0
libtpu: 0.0.40
codegen_flags: <defaults>
</compile_context>

<pallas_src>
from functools import lru_cache

import numpy as np
import jax
import jax.numpy as jnp
from jax.experimental import pallas as pl
from jax.experimental.pallas import tpu as pltpu


# ----------------------------------------------------------------------------
# Kernel
# ----------------------------------------------------------------------------
def _fft_amp_kernel(x_ref, w2t_ref, out_ref):
    """One grid step == Bb batch elements.

    x_ref   : (Bb, T, N)       bf16 input tile
    w2t_ref : (T, 2*F_pad)     bf16 fused real-DFT basis [cos | -sin], resident
    out_ref : (Bb, F_pad) f32  mean-over-nodes amplitude spectrum per batch
    """
    bb, _, n_nodes = x_ref.shape
    f_pad = out_ref.shape[-1]
    inv_n = jnp.float32(1.0 / n_nodes)
    w2t = w2t_ref[...]                                   # stays in VMEM

    rows = []
    for b in range(bb):                                  # static unroll, Bb <= 8
        xb = x_ref[b]                                    # (T, N) bf16
        # Contract over T: (T, N) x (T, 2F_pad) -> (N, 2F_pad), f32 accumulate.
        z = jax.lax.dot_general(
            xb, w2t, (((0,), (0,)), ((), ())),
            preferred_element_type=jnp.float32)
        re = z[:, :f_pad]                                # tile-aligned lane slice
        im = z[:, f_pad:]
        amp = jnp.sqrt(re * re + im * im)                # (N, F_pad)
        # Node mean = sublane reduce -> lane-dense (1, F_pad) row.
        rows.append(jnp.sum(amp, axis=0, keepdims=True) * inv_n)

    out_ref[...] = jnp.concatenate(rows, axis=0)         # (Bb, F_pad), one store


# ----------------------------------------------------------------------------
# Cached fused real-DFT basis
# ----------------------------------------------------------------------------
@lru_cache(maxsize=8)
def _dft_basis(seq_len: int, f_pad: int):
    """W2ᵀ = [cos | -sin], shape (seq_len, 2*f_pad), bf16.

    Columns f in [0, seq_len//2+1) are the valid rfft frequencies; padded
    columns are exactly zero (their amplitude is 0 and is sliced off later).
    Built once per (seq_len, f_pad) in float64, then quantized to bf16.
    """
    n_freq = seq_len // 2 + 1
    t = np.arange(seq_len, dtype=np.float64)
    f = np.arange(f_pad, dtype=np.float64)
    ang = 2.0 * np.pi * np.outer(t, f) / float(seq_len)          # (T, f_pad)
    valid = (f < n_freq)[None, :]
    wr = np.where(valid, np.cos(ang), 0.0)
    wi = np.where(valid, -np.sin(ang), 0.0)
    w2t = np.concatenate([wr, wi], axis=1).astype(np.float32)    # (T, 2*f_pad)
    return jnp.asarray(w2t).astype(jnp.bfloat16)


def _pick_bb(batch: int, seq_len: int, num_nodes: int, f_pad: int,
             budget_bytes: int = 32 << 20) -> int:
    """Batch elements per grid step: big enough to amortize per-step overhead,
    small enough to fit VMEM and to keep >= 2 grid steps (v7x megacore)."""
    bb = min(8, max(1, batch))
    basis_bytes = 2 * (seq_len * 2 * f_pad * 2)                  # double-buffer bound
    while bb > 1 and (2 * bb * seq_len * num_nodes * 2 + basis_bytes) > budget_bytes:
        bb = max(1, bb // 2)
    while bb > 1 and -(-batch // bb) < 2:                        # keep grid >= 2
        bb = max(1, bb // 2)
    return bb


_BASIS_SINGLE_BUFFER_OK = True   # cache whether pipeline_mode=pl.Buffered(1) works


# ----------------------------------------------------------------------------
# Pallas-backed amplitude spectrum (the hot part of FFT_for_Period)
# ----------------------------------------------------------------------------
def fft_amplitude(x_enc):
    """Returns:
      amp_mean : (B, F) == abs(rfft(x, dim=1)).mean(-1)
      freq     : (F,)   == abs(rfft(x, dim=1)).mean(0).mean(-1)
    """
    global _BASIS_SINGLE_BUFFER_OK
    B, T, N = x_enc.shape
    F_ = T // 2 + 1
    F_pad = ((F_ + 127) // 128) * 128            # F is the lane axis -> pad to 128

    Bb = _pick_bb(B, T, N, F_pad)
    G = -(-B // Bb)
    Bpad = G * Bb

    x_lp = x_enc.astype(jnp.bfloat16)            # halve HBM traffic; MXU-native bf16
    if Bpad != B:                                # pad batch with zero rows (amp==0)
        x_lp = jnp.concatenate(
            [x_lp, jnp.zeros((Bpad - B, T, N), dtype=x_lp.dtype)], axis=0)

    w2t = _dft_basis(T, F_pad)                   # (T, 2*F_pad) bf16, cached per T

    # Explicit VMEM sizing (review: don't blanket-request 64 MiB on v7x).
    bytes_in = Bb * T * N * 2
    bytes_basis = T * 2 * F_pad * 2
    bytes_out = Bb * F_pad * 4
    vmem_need = 2 * bytes_in + 2 * bytes_basis + 2 * bytes_out
    vmem_limit = int(min(max(vmem_need + (2 << 20), 32 << 20), 112 << 20))

    def _build(basis_single_buffered: bool):
        basis_kwargs = {}
        if basis_single_buffered:
            # Constant-index resident basis: no need for a second buffer.
            basis_kwargs = dict(pipeline_mode=pl.Buffered(1))
        return pl.pallas_call(
            _fft_amp_kernel,
            out_shape=jax.ShapeDtypeStruct((G, Bb, F_pad), jnp.float32),
            grid=(G,),
            in_specs=[
                pl.BlockSpec((Bb, T, N), lambda g: (g, 0, 0)),        # Bb batches/step
                pl.BlockSpec((T, 2 * F_pad), lambda g: (0, 0), **basis_kwargs),
            ],
            out_specs=pl.BlockSpec((pl.Squeezed(), Bb, F_pad),
                                   lambda g: (g, 0, 0)),              # lane-dense out
            compiler_params=pltpu.CompilerParams(
                dimension_semantics=("parallel",),                    # independent steps
                vmem_limit_bytes=vmem_limit,
            ),
        )

    if _BASIS_SINGLE_BUFFER_OK:
        try:
            amp3 = _build(True)(x_lp, w2t)
        except Exception:  # older jax without Buffered(1) support -> default buffering
            _BASIS_SINGLE_BUFFER_OK = False
            amp3 = _build(False)(x_lp, w2t)
    else:
        amp3 = _build(False)(x_lp, w2t)

    amp_mean = amp3.reshape(Bpad, F_pad)[:B, :F_]        # drop batch/freq padding
    freq = jnp.mean(amp_mean, axis=0)                    # tiny (B,F) reduce in JAX
    return amp_mean, freq


# ----------------------------------------------------------------------------
# MutiScaleBlock.forward
# ----------------------------------------------------------------------------
def muti_scale_block(x_enc, *, seq_len, top_k, precomputed_fft=None):
    """JAX/Pallas port of MutiScaleBlock.forward.

    Returns (scale_list, scale_sizes, scale_nums), matching PyTorch semantics.
    """
    bs, dimension, num_nodes = x_enc.shape
    assert dimension == seq_len

    # --- FFT_for_Period (hot path in Pallas) ---
    if precomputed_fft is None:
        amp_mean, freq_list = fft_amplitude(x_enc)       # (B, F), (F,)
    else:
        amp_mean, freq_list = precomputed_fft
    freq_list = freq_list.at[0].set(0.0)                 # frequency_list[0] = 0
    _, top_idx = jax.lax.top_k(freq_list, top_k)
    top_list = np.asarray(jax.device_get(top_idx))       # like .detach().cpu().numpy()
    # NOTE: PyTorch would divide by zero if bin 0 ever landed in top-k; guarded here.
    period = seq_len // np.maximum(top_list, 1)
    # scale_weight = amp_mean[:, top_list] is computed by the PyTorch code but never
    # used by forward -> dead gather removed (perf review).

    scale_list = period
    scale_sizes = []
    scale_nums = []
    for i in range(top_k):
        scale = int(scale_list[i])
        if seq_len % scale != 0:
            length = (seq_len // scale + 1) * scale
            padding = jnp.zeros((bs, length - seq_len, num_nodes), dtype=x_enc.dtype)
            out = jnp.concatenate([x_enc, padding], axis=1)
        else:
            length = seq_len
            out = x_enc
        scale_num = length // scale
        out = out.reshape(bs, length // scale, scale, num_nodes)
        scale_nums.append(scale_num)
        scale_sizes.append(out)
    return scale_list, scale_sizes, scale_nums


if __name__ == "__main__":
    key = jax.random.PRNGKey(0)
    bs, seq_len, num_nodes, top_k = 2, 16, 4, 2
    x_enc = jax.random.normal(key, (bs, seq_len, num_nodes), dtype=jnp.float32)

    # Single kernel invocation, reused for both the module forward and the checks.
    amp_mean, freq = fft_amplitude(x_enc)
    jax.block_until_ready(amp_mean)

    scale_list, scale_sizes, scale_nums = muti_scale_block(
        x_enc, seq_len=seq_len, top_k=top_k, precomputed_fft=(amp_mean, freq))
    for o in scale_sizes:
        jax.block_until_ready(o)

    # Numerical check vs jnp.fft (inputs/basis fed to the MXU in bf16 -> loose tol).
    xf = jnp.fft.rfft(x_enc, axis=1)
    amp_ref = jnp.abs(xf)                                  # (B, F, N)
    np.testing.assert_allclose(np.asarray(amp_mean),
                               np.asarray(amp_ref.mean(-1)),
                               rtol=2e-2, atol=2e-2)
    np.testing.assert_allclose(np.asarray(freq),
                               np.asarray(amp_ref.mean(0).mean(-1)),
                               rtol=2e-2, atol=2e-2)

    # Shape checks mirroring the PyTorch reshape semantics.
    for i in range(top_k):
        scale = int(scale_list[i])
        length = seq_len if seq_len % scale == 0 else (seq_len // scale + 1) * scale
        assert scale_sizes[i].shape == (bs, length // scale, scale, num_nodes)
        assert scale_nums[i] == length // scale

    print("KERNEL_OK")
</pallas_src>

<mosaic_0001>
module attributes {stable_mosaic.version = 11 : i64} {
  func.func @_fft_amp_kernel(%arg0: i32, %arg1: memref<1x16x4xbf16, #tpu.memory_space<vmem>>, %arg2: memref<16x256xbf16, #tpu.memory_space<vmem>>, %arg3: memref<1x1x128xf32, #tpu.memory_space<vmem>>) attributes {dimension_semantics = [#tpu.dimension_semantics<parallel>], iteration_bounds = array<i64: 2>, scalar_prefetch = 0 : i64, scratch_operands = 0 : i64, tpu.core_type = #tpu.core_type<tc>, window_params = [{transform_indices = @transform_0, window_bounds = array<i64: 1, 16, 4>}, {pipeline_mode = #tpu.pipeline_mode<synchronous>, transform_indices = @transform_1, window_bounds = array<i64: 16, 256>}, {transform_indices = @transform_2, window_bounds = array<i64: 1, 1, 128>}]} {
    %c0 = arith.constant 0 : index
    %c0_0 = arith.constant 0 : index
    %0 = vector.load %arg2[%c0, %c0_0] : memref<16x256xbf16, #tpu.memory_space<vmem>>, vector<16x256xbf16>
    %c0_1 = arith.constant 0 : index
    %c0_2 = arith.constant 0 : index
    %c0_3 = arith.constant 0 : index
    %1 = vector.load %arg1[%c0_1, %c0_2, %c0_3] : memref<1x16x4xbf16, #tpu.memory_space<vmem>>, vector<1x16x4xbf16>
    %2 = vector.shape_cast %1 : vector<1x16x4xbf16> to vector<16x4xbf16>
    %cst = arith.constant dense<0.000000e+00> : vector<4x256xf32>
    %3 = tpu.matmul %2, %0, %cst {dimension_numbers = #tpu.dot_dimension_numbers<[0], [0], [1], [1], [0, 1, 1, 1], [], []>} : vector<16x4xbf16>, vector<16x256xbf16>, vector<4x256xf32> -> vector<4x256xf32>
    %4 = vector.extract_strided_slice %3 {offsets = [0, 0], sizes = [4, 128], strides = [1, 1]} : vector<4x256xf32> to vector<4x128xf32>
    %5 = vector.extract_strided_slice %3 {offsets = [0, 128], sizes = [4, 128], strides = [1, 1]} : vector<4x256xf32> to vector<4x128xf32>
    %6 = arith.mulf %4, %4 : vector<4x128xf32>
    %7 = arith.mulf %5, %5 : vector<4x128xf32>
    %8 = arith.addf %6, %7 : vector<4x128xf32>
    %9 = math.sqrt %8 : vector<4x128xf32>
    %cst_4 = arith.constant dense<0.000000e+00> : vector<128xf32>
    %10 = vector.multi_reduction <add>, %9, %cst_4 [0] : vector<4x128xf32> to vector<128xf32>
    %11 = vector.shape_cast %10 : vector<128xf32> to vector<1x128xf32>
    %cst_5 = arith.constant 2.500000e-01 : f32
    %12 = vector.broadcast %cst_5 : f32 to vector<1x128xf32>
    %13 = arith.mulf %11, %12 : vector<1x128xf32>
    %c0_6 = arith.constant 0 : index
    %c0_7 = arith.constant 0 : index
    %c0_8 = arith.constant 0 : index
    %14 = vector.load %arg3[%c0_6, %c0_7, %c0_8] : memref<1x1x128xf32, #tpu.memory_space<vmem>>, vector<1x1x128xf32>
    %15 = vector.shape_cast %14 : vector<1x1x128xf32> to vector<1x128xf32>
    %16 = vector.shape_cast %13 : vector<1x128xf32> to vector<1x1x128xf32>
    tpu.vector_store %arg3[%c0_6, %c0_7, %c0_8], %16 {strides = array<i32>} : memref<1x1x128xf32, #tpu.memory_space<vmem>>, vector<1x1x128xf32>,
    return
  }
  func.func @transform_0(%arg0: i32) -> (i32, i32, i32) {
    %c0_i32 = arith.constant 0 : i32
    %c0_i32_0 = arith.constant 0 : i32
    %c0_i32_1 = arith.constant 0 : i32
    return %arg0, %c0_i32, %c0_i32_0 : i32, i32, i32
  }
  func.func @transform_1(%arg0: i32) -> (i32, i32) {
    %c0_i32 = arith.constant 0 : i32
    %c0_i32_0 = arith.constant 0 : i32
    %c0_i32_1 = arith.constant 0 : i32
    return %c0_i32, %c0_i32_0 : i32, i32
  }
  func.func @transform_2(%arg0: i32) -> (i32, i32, i32) {
    %c0_i32 = arith.constant 0 : i32
    %c0_i32_0 = arith.constant 0 : i32
    %c0_i32_1 = arith.constant 0 : i32
    return %arg0, %c0_i32, %c0_i32_0 : i32, i32, i32
  }
}

module attributes {stable_mosaic.version = 11 : i64} {
  func.func @_fft_amp_kernel(%arg0: i32, %arg1: memref<1x16x4xbf16, #tpu.memory_space<vmem>>, %arg2: memref<16x256xbf16, #tpu.memory_space<vmem>>, %arg3: memref<1x1x128xf32, #tpu.memory_space<vmem>>) attributes {dimension_semantics = [#tpu.dimension_semantics<parallel>], iteration_bounds = array<i64: 2>, scalar_prefetch = 0 : i64, scratch_operands = 0 : i64, tpu.core_type = #tpu.core_type<tc>, window_params = [{transform_indices = @transform_0, window_bounds = array<i64: 1, 16, 4>}, {pipeline_mode = #tpu.pipeline_mode<synchronous>, transform_indices = @transform_1, window_bounds = array<i64: 16, 256>}, {transform_indices = @transform_2, window_bounds = array<i64: 1, 1, 128>}]} {
    %c0 = arith.constant 0 : index
    %c0_0 = arith.constant 0 : index
    %0 = vector.load %arg2[%c0, %c0_0] : memref<16x256xbf16, #tpu.memory_space<vmem>>, vector<16x256xbf16>
    %c0_1 = arith.constant 0 : index
    %c0_2 = arith.constant 0 : index
    %c0_3 = arith.constant 0 : index
    %1 = vector.load %arg1[%c0_1, %c0_2, %c0_3] : memref<1x16x4xbf16, #tpu.memory_space<vmem>>, vector<1x16x4xbf16>
    %2 = vector.shape_cast %1 : vector<1x16x4xbf16> to vector<16x4xbf16>
    %cst = arith.constant dense<0.000000e+00> : vector<4x256xf32>
    %3 = tpu.matmul %2, %0, %cst {dimension_numbers = #tpu.dot_dimension_numbers<[0], [0], [1], [1], [0, 1, 1, 1], [], []>} : vector<16x4xbf16>, vector<16x256xbf16>, vector<4x256xf32> -> vector<4x256xf32>
    %4 = vector.extract_strided_slice %3 {offsets = [0, 0], sizes = [4, 128], strides = [1, 1]} : vector<4x256xf32> to vector<4x128xf32>
    %5 = vector.extract_strided_slice %3 {offsets = [0, 128], sizes = [4, 128], strides = [1, 1]} : vector<4x256xf32> to vector<4x128xf32>
    %6 = arith.mulf %4, %4 : vector<4x128xf32>
    %7 = arith.mulf %5, %5 : vector<4x128xf32>
    %8 = arith.addf %6, %7 : vector<4x128xf32>
    %9 = math.sqrt %8 : vector<4x128xf32>
    %cst_4 = arith.constant dense<0.000000e+00> : vector<128xf32>
    %10 = vector.multi_reduction <add>, %9, %cst_4 [0] : vector<4x128xf32> to vector<128xf32>
    %11 = vector.shape_cast %10 : vector<128xf32> to vector<1x128xf32>
    %cst_5 = arith.constant 2.500000e-01 : f32
    %12 = vector.broadcast %cst_5 : f32 to vector<1x128xf32>
    %13 = arith.mulf %11, %12 : vector<1x128xf32>
    %c0_6 = arith.constant 0 : index
    %c0_7 = arith.constant 0 : index
    %c0_8 = arith.constant 0 : index
    %14 = vector.load %arg3[%c0_6, %c0_7, %c0_8] : memref<1x1x128xf32, #tpu.memory_space<vmem>>, vector<1x1x128xf32>
    %15 = vector.shape_cast %14 : vector<1x1x128xf32> to vector<1x128xf32>
    %16 = vector.shape_cast %13 : vector<1x128xf32> to vector<1x1x128xf32>
    tpu.vector_store %arg3[%c0_6, %c0_7, %c0_8], %16 {strides = array<i32>} : memref<1x1x128xf32, #tpu.memory_space<vmem>>, vector<1x1x128xf32>,
    return
  }
  func.func @transform_0(%arg0: i32) -> (i32, i32, i32) {
    %c0_i32 = arith.constant 0 : i32
    %c0_i32_0 = arith.constant 0 : i32
    %c0_i32_1 = arith.constant 0 : i32
    return %arg0, %c0_i32, %c0_i32_0 : i32, i32, i32
  }
  func.func @transform_1(%arg0: i32) -> (i32, i32) {
    %c0_i32 = arith.constant 0 : i32
    %c0_i32_0 = arith.constant 0 : i32
    %c0_i32_1 = arith.constant 0 : i32
    return %c0_i32, %c0_i32_0 : i32, i32
  }
  func.func @transform_2(%arg0: i32) -> (i32, i32, i32) {
    %c0_i32 = arith.constant 0 : i32
    %c0_i32_0 = arith.constant 0 : i32
    %c0_i32_1 = arith.constant 0 : i32
    return %arg0, %c0_i32, %c0_i32_0 : i32, i32, i32
  }
}

</mosaic_0001>

<llo_original>
// kernel: tpu_custom_call.1
$region0: #{tpu_custom_call.1}
  #allocation0 [shape = 'u32[]', space=smem, size = 0x4, offset = 0x4, fixed_abs, tag = 'smem constant byte address 0x4 - core index']
  #allocation1 [shape = 'u32[144,128]{1,0:T(1,128)}', space=vmem, size = 0x12000, scoped, tag = 'internal scratch']
  %s0 = inlined_call_operand.vmem [shape: bf16[2,16,4], index: 0, kind: input, shape index: {}]
  %s1 = inlined_call_operand.vmem [shape: bf16[16,256], index: 1, kind: input, shape index: {}]
  %s2 = inlined_call_operand.hbm [shape: f32[2,1,128], index: 2, kind: output, shape index: {}]
  %s3 = sld [smem:[#allocation0]]
  $region41: #{tpu_custom_call.1} parent=0
    _
  %s5 = ssub.s32 1, %s3
  %s6 = scalar_select 0, %s5, %s3
  $region1: #{tpu_custom_call.1} parent=0
    #allocation2 [shape = 'u8[1024]{0}', space=vmem, size = 0x400, scoped, tag = 'output window, operand 0']
    #allocation3 [shape = 's32[2]{0}', space=sflag, size = 0x8, scoped, tag = 'scoped memory for tpu_custom_call.1']
    %7 = vsyncpa [#allocation3], 0
    %s8 = scalar_lea.sflag [#allocation3], 1
    %9 = vsyncpa %s8, 0
    loop: start=0, step=1, limit=4
    $region2: #{tpu_custom_call.1} parent=1 // loop_pre_header
      _
    $region3: #{tpu_custom_call.1} parent=1 // loop_header
      %s11 = sphi 0, %s15
      %p12 = scmp.ge.s32.totalorder %s11, 4
      %s21 = sphi 0, %s23
      %s24 = sphi 0, %s21
      %s25 = sphi 0, %s24
      %s41 = sphi 0, %s25
      %s45 = sphi 0, %s45
      %s47 = sphi 0, %s45
      %s48 = sphi 0, %s47
      %s62 = sphi 0, %s48
      %s68 = sphi 0, %s70
      %s71 = sphi 0, %s68
      %s72 = sphi 0, %s71
      %s88 = sphi 0, %s72
    $region4: #{tpu_custom_call.1} parent=1 // loop_header_branch
      %14 = sbr.rel (%p12) target = $region8
    $region5: #{tpu_custom_call.1} parent=1 // loop_body
      %s16 = ssub.s32 %s11, 1
      %s17 = ssub.s32 %s11, 2
      %s18 = sadd.s32 %s11, 1
      %s19 = ssub.s32 %s11, %s18
      %p20 = scmp.eq.s32.totalorder %s19, 0
      %s22 = sadd.s32 %s21, 1
      %s23 = scalar_select %p20, %s21, %s22
      %p26 = pneg %p20
      %p27 = scmp.eq.s32.totalorder %s11, 1
      %p28 = por %p26, %p27
      %p29 = scmp.ne.s32.totalorder %s21, %s24
      %p30 = scmp.eq.s32.totalorder %s11, 0
      %p31 = por %p29, %p30
      %p32 = scmp.ne.s32.totalorder %s21, %s24
      %p33 = scmp.eq.s32.totalorder %s16, 1
      %p34 = por %p32, %p33
      %p35 = scmp.ne.s32.totalorder %s24, %s25
      %p36 = scmp.eq.s32.totalorder %s16, 0
      %p37 = por %p35, %p36
      %p38 = scmp.ne.s32.totalorder %s24, %s25
      %p39 = scmp.eq.s32.totalorder %s17, 1
      %p40 = por %p38, %p39
      %p42 = scmp.ne.s32.totalorder %s25, %s41
      %p43 = scmp.eq.s32.totalorder %s17, 0
      %p44 = por %p42, %p43
      %s46 = sadd.s32 %s45, 1
      %p49 = scmp.eq.s32.totalorder %s11, 1
      %p50 = scmp.ne.s32.totalorder %s45, %s47
      %p51 = scmp.eq.s32.totalorder %s11, 0
      %p52 = por %p50, %p51
      %p53 = scmp.ne.s32.totalorder %s45, %s47
      %p54 = scmp.eq.s32.totalorder %s16, 1
      %p55 = por %p53, %p54
      %p56 = scmp.ne.s32.totalorder %s47, %s48
      %p57 = scmp.eq.s32.totalorder %s16, 0
      %p58 = por %p56, %p57
      %p59 = scmp.ne.s32.totalorder %s47, %s48
      %p60 = scmp.eq.s32.totalorder %s17, 1
      %p61 = por %p59, %p60
      %p63 = scmp.ne.s32.totalorder %s48, %s62
      %p64 = scmp.eq.s32.totalorder %s17, 0
      %p65 = por %p63, %p64
      %s66 = ssub.s32 %s11, %s18
      %p67 = scmp.eq.s32.totalorder %s66, 0
      %s69 = sadd.s32 %s68, 1
      %s70 = scalar_select %p67, %s68, %s69
      %p73 = pneg %p67
      %p74 = scmp.eq.s32.totalorder %s11, 1
      %p75 = por %p73, %p74
      %p76 = scmp.ne.s32.totalorder %s68, %s71
      %p77 = scmp.eq.s32.totalorder %s11, 0
      %p78 = por %p76, %p77
      %p79 = scmp.ne.s32.totalorder %s68, %s71
      %p80 = scmp.eq.s32.totalorder %s16, 1
      %p81 = por %p79, %p80
      %p82 = scmp.ne.s32.totalorder %s71, %s72
      %p83 = scmp.eq.s32.totalorder %s16, 0
      %p84 = por %p82, %p83
      %p85 = scmp.ne.s32.totalorder %s71, %s72
      %p86 = scmp.eq.s32.totalorder %s17, 1
      %p87 = por %p85, %p86
      %p89 = scmp.ne.s32.totalorder %s72, %s88
      %p90 = scmp.eq.s32.totalorder %s17, 0
      %p91 = por %p89, %p90
      %p92 = scmp.le.s32.totalorder 1, %s11
      %p93 = scmp.lt.s32.totalorder %s11, 3
      %p94 = pnand %p92, %p93
      %p95 = pneg %p94
      // Predicated region
      $region9: #{tpu_custom_call.1} parent=5 // pred_check
        _
      $region10: #{tpu_custom_call.1} parent=5 // pred_check_branch
        %97 = sbr.rel (%p94) target = $region12
      $region11: #{tpu_custom_call.1} parent=5 // pred_region
        %s98 = ssub.s32 %s11, 1
        // Predicated region
        $region13: #{tpu_custom_call.1} parent=11 // pred_check
          %p99 = pneg %p58
        $region14: #{tpu_custom_call.1} parent=11 // pred_check_branch
          %101 = sbr.rel (%p99) target = $region16
        $region15: #{tpu_custom_call.1} parent=11 // pred_region
          _
        $region16: #{tpu_custom_call.1} parent=11 // pred_fallthru
          _
      $region12: #{tpu_custom_call.1} parent=5 // pred_fallthru
        _
      %p102 = scmp.lt.s32.totalorder %s11, 2
      // Predicated region
      $region17: #{tpu_custom_call.1} parent=5 // pred_check
        %p103 = pneg %p102
      $region18: #{tpu_custom_call.1} parent=5 // pred_check_branch
        %105 = sbr.rel (%p103) target = $region20
      $region19: #{tpu_custom_call.1} parent=5 // pred_region
        // Predicated region
        $region21: #{tpu_custom_call.1} parent=19 // pred_check
          %p106 = pneg %p31
        $region22: #{tpu_custom_call.1} parent=19 // pred_check_branch
          %108 = sbr.rel (%p106) target = $region24
        $region23: #{tpu_custom_call.1} parent=19 // pred_region
          %p109 = scmp.lt.s32.totalorder %s11, 1
          %s110 = scalar_select %p109, %s11, 1
          %s111 = smul.addr %s110, 2
          %s112 = smul.addr %s111, 4
          %s113 = scalar_lea.vmem %s0, %s112
        $region24: #{tpu_custom_call.1} parent=19 // pred_fallthru
          _
      $region20: #{tpu_custom_call.1} parent=5 // pred_fallthru
        _
      %p114 = scmp.le.s32.totalorder 1, %s11
      %p115 = scmp.lt.s32.totalorder %s11, 3
      %p116 = pnand %p114, %p115
      %p117 = pneg %p116
      // Predicated region
      $region25: #{tpu_custom_call.1} parent=5 // pred_check
        _
      $region26: #{tpu_custom_call.1} parent=5 // pred_check_branch
        %119 = sbr.rel (%p116) target = $region28
      $region27: #{tpu_custom_call.1} parent=5 // pred_region
        %s120 = ssub.s32 %s11, 1
        %p121 = scmp.lt.s32.totalorder %s16, 1
        %s122 = scalar_select %p121, %s16, 1
        %s123 = smul.addr %s122, 2
        %s124 = smul.addr %s123, 4
        %s125 = scalar_lea.vmem %s0, %s124
        %p126 = pneg %p37
        %p127 = pneg %p34
        %p128 = pneg %p58
        %p129 = pneg %p55
        %p130 = pneg %p84
        %p131 = pneg %p81
        %s132 = sand.u32 %s71, 1
        %s133 = scalar_lea.sflag [#allocation3], %s132
        %s134 = sand.u32 %s71, 1
        %s135 = scalar_lea.vmem [#allocation2], %s134
        %p136 = scmp.lt.s32.totalorder %s16, 1
        %s137 = scalar_select %p136, %s16, 1
        %s138 = smul.addr %s137, 2
        %s139 = smul.addr %s138, 4
        %s140 = scalar_lea.vmem %s0, %s139
        %v142 = vld [vmem:[%s1] sm:$0xff]
        %v143 = vld [vmem:[%s1 + $0x8] sm:$0xff]
        %v144 = vld [vmem:[%s140] sm:$0xf]
        %v145 = vld [vmem:[%s140 + $0x4] sm:$0xf]
        %v148 = vunpack.c.l.b16 %v144
        %v149 = vunpack.c.l.b16 %v145
        %v150 = vpack.c.b16 %v149, %v148
        %152 = vxpose.xlu0.c.b16.start [1/8] %v150, 128
        %153 = vxpose.xlu0.c.b16.cont [2/8] 0, 128
        %154 = vxpose.xlu0.c.b16.cont [3/8] 0, 128
        %155 = vxpose.xlu0.c.b16.cont [4/8] 0, 128
        %156 = vxpose.xlu0.c.b16.cont [5/8] 0, 128
        %157 = vxpose.xlu0.c.b16.cont [6/8] 0, 128
        %158 = vxpose.xlu0.c.b16.cont [7/8] 0, 128
        %159 = vxpose.xlu0.c.b16.end [8/8] 0, 128
        %v160 = vpop.trf.xlu0
        %v161 = vpop.trf.xlu0
        %v162 = vpop.trf.xlu0
        %v163 = vpop.trf.xlu0
        %v164 = vpop.trf.xlu0
        %v165 = vpop.trf.xlu0
        %v166 = vpop.trf.xlu0
        %v167 = vpop.trf.xlu0
        %v170 = vunpack.c.l.b16 %v142
        %v171 = vunpack.c.h.b16 %v142
        %v172 = vunpack.c.l.b16 %v143
        %v173 = vunpack.c.h.b16 %v143
        %v174 = vpack.c.b16 %v172, %v170
        %v175 = vpack.c.b16 %v173, %v171
        %vm178 = vcmask 130048
        %v180 = vsel %vm178, %v160, 0
        %182 = vmatprep.subr.bf16.mxu0 %v175
        %183 = vmatpush1.bf16.msra.mxu0 %v174
        %184 = vmatprep.subr.bf16.mxu0 0
        %185 = vmatpush1.bf16.msra.mxu0 0
        %186 = vmatprep.subr.bf16.mxu0 0
        %187 = vmatpush1.bf16.msra.mxu0 0
        %188 = vmatprep.subr.bf16.mxu0 0
        %189 = vmatpush1.bf16.msra.mxu0 0
        %190 = vmatprep.subr.bf16.mxu0 0
        %191 = vmatpush1.bf16.msra.mxu0 0
        %192 = vmatprep.subr.bf16.mxu0 0
        %193 = vmatpush1.bf16.msra.mxu0 0
        %194 = vmatprep.subr.bf16.mxu0 0
        %195 = vmatpush1.bf16.msra.mxu0 0
        %196 = vmatprep.subr.bf16.mxu0 0
        %197 = vmatpush1.bf16.msra.mxu0 0
        %198 = vmatprep.subr.bf16.mxu0 0
        %199 = vmatpush1.bf16.msra.mxu0 0
        %200 = vmatprep.subr.bf16.mxu0 0
        %201 = vmatpush1.bf16.msra.mxu0 0
        %202 = vmatprep.subr.bf16.mxu0 0
        %203 = vmatpush1.bf16.msra.mxu0 0
        %204 = vmatprep.subr.bf16.mxu0 0
        %205 = vmatpush1.bf16.msra.mxu0 0
        %206 = vmatprep.subr.bf16.mxu0 0
        %207 = vmatpush1.bf16.msra.mxu0 0
        %208 = vmatprep.subr.bf16.mxu0 0
        %209 = vmatpush1.bf16.msra.mxu0 0
        %210 = vmatprep.subr.bf16.mxu0 0
        %211 = vmatpush1.bf16.msra.mxu0 0
        %212 = vmatprep.subr.bf16.mxu0 0
        %213 = vmatpush1.bf16.msra.mxu0 0
        %214 = vmatprep.mubr.bf16.mxu0 0
        %215 = vmatmul.mubr.bf16.gmra.mrb[0].mxu0 %v180
        %v216 = vpop.f32.mrb[0].mxu0
        %v217 = vadd.f32 0.0, %v216
        %v218 = vpop.f32.mrb[0].mxu0
        %v219 = vadd.f32 0.0, %v218
        %v220 = vpop.f32.mrb[0].mxu0
        %v221 = vpop.f32.mrb[0].mxu0
        %222 = vdwg.mxu0
        %v223 = vmul.f32 %v217, %v217
        %v224 = vmul.f32 %v219, %v219
        %v225 = vadd.f32 %v223, %v224
        %v226 = vrsqrt.pop %v225
        %v227 = vmul.f32 %v225, %v226
        %vm228 = vcmp.eq.f32.partialorder %v225, inf
        %v229 = vsel %vm228, %v225, %v227
        %vm230 = vcmp.eq.f32.partialorder %v225, 0.0
        %v231 = vand.u32 %v225, 2147483648
        %v232 = vsel %vm230, %v231, %v229
        %vm233 = vcmask 1043456
        %v234 = vsel %vm233, %v232, 0.0
        %v235 = vrot.slane %v234, 4
        %v236 = vadd.f32 %v234, %v235
        %v237 = vrot.slane %v236, 2
        %v238 = vadd.f32 %v236, %v237
        %v239 = vrot.slane %v238, 1
        %v240 = vadd.f32 %v238, %v239
        %v241 = vmul.f32 %v240, 0.25
        %242 = vst [vmem:[%s135] sm:$0x1] %v241
        %s243 = sand.u32 %s71, 1
        %s244 = scalar_lea.sflag [#allocation3], %s243
        %s245 = sand.u32 %s71, 1
        %s246 = scalar_lea.vmem [#allocation2], %s245
        // Predicated region
        $region29: #{tpu_custom_call.1} parent=27 // pred_check
          %p247 = pneg %p81
        $region30: #{tpu_custom_call.1} parent=27 // pred_check_branch
          %249 = sbr.rel (%p247) target = $region32
        $region31: #{tpu_custom_call.1} parent=27 // pred_region
          %s251 = ssub.s32 16, 16
          %252 = vsyncadd %s244, %s251
          %s253 = smul.addr %s16, 16
          %s254 = scalar_lea.hbm %s2, %s253
          %s256 = sshll.u32 %s246, 4
          %s257 = int_to_ptr.vmem [resolvable:$true] %s256
          %259 = dma.vmem_to_hbm [thread:$0]  %s257, 16, %s254, %s244
        $region32: #{tpu_custom_call.1} parent=27 // pred_fallthru
          _
      $region28: #{tpu_custom_call.1} parent=5 // pred_fallthru
        _
      %p260 = scmp.le.s32.totalorder 2, %s11
      // Predicated region
      $region33: #{tpu_custom_call.1} parent=5 // pred_check
        %p261 = pneg %p260
      $region34: #{tpu_custom_call.1} parent=5 // pred_check_branch
        %263 = sbr.rel (%p261) target = $region36
      $region35: #{tpu_custom_call.1} parent=5 // pred_region
        %s264 = ssub.s32 %s11, 2
        // Predicated region
        $region37: #{tpu_custom_call.1} parent=35 // pred_check
          %p265 = pneg %p87
        $region38: #{tpu_custom_call.1} parent=35 // pred_check_branch
          %267 = sbr.rel (%p265) target = $region40
        $region39: #{tpu_custom_call.1} parent=35 // pred_region
          %s268 = sand.u32 %s72, 1
          %s269 = scalar_lea.sflag [#allocation3], %s268
          %s270 = sand.u32 %s72, 1
          %s271 = scalar_lea.vmem [#allocation2], %s270
          %272 = dma.done %s269, 16
        $region40: #{tpu_custom_call.1} parent=35 // pred_fallthru
          _
      $region36: #{tpu_custom_call.1} parent=5 // pred_fallthru
        _
    $region6: #{tpu_custom_call.1} parent=1 // loop_footer
      %s15 = sadd.s32 1, %s11
    $region7: #{tpu_custom_call.1} parent=1 // loop_footer_branch
      %10 = sbr.rel target = $region3
    $region8: #{tpu_custom_call.1} parent=1 // loop_exit
      _
    %273 = vsyncpa [#allocation3], 1
    %s274 = scalar_lea.sflag [#allocation3], 1
    %275 = vsyncpa %s274, 1

// kernel: tpu_custom_call.1
$region0: #{tpu_custom_call.1}
  #allocation0 [shape = 'u32[]', space=smem, size = 0x4, offset = 0x4, fixed_abs, tag = 'smem constant byte address 0x4 - core index']
  #allocation1 [shape = 'u32[144,128]{1,0:T(1,128)}', space=vmem, size = 0x12000, scoped, tag = 'internal scratch']
  %s0 = inlined_call_operand.vmem [shape: bf16[2,16,4], index: 0, kind: input, shape index: {}]
  %s1 = inlined_call_operand.vmem [shape: bf16[16,256], index: 1, kind: input, shape index: {}]
  %s2 = inlined_call_operand.hbm [shape: f32[2,1,128], index: 2, kind: output, shape index: {}]
  %s3 = sld [smem:[#allocation0]]
  $region41: #{tpu_custom_call.1} parent=0
    _
  %s5 = ssub.s32 1, %s3
  %s6 = scalar_select 0, %s5, %s3
  $region1: #{tpu_custom_call.1} parent=0
    #allocation2 [shape = 'u8[1024]{0}', space=vmem, size = 0x400, scoped, tag = 'output window, operand 0']
    #allocation3 [shape = 's32[2]{0}', space=sflag, size = 0x8, scoped, tag = 'scoped memory for tpu_custom_call.1']
    %7 = vsyncpa [#allocation3], 0
    %s8 = scalar_lea.sflag [#allocation3], 1
    %9 = vsyncpa %s8, 0
    loop: start=0, step=1, limit=4
    $region2: #{tpu_custom_call.1} parent=1 // loop_pre_header
      _
    $region3: #{tpu_custom_call.1} parent=1 // loop_header
      %s11 = sphi 0, %s15
      %p12 = scmp.ge.s32.totalorder %s11, 4
      %s21 = sphi 0, %s23
      %s24 = sphi 0, %s21
      %s25 = sphi 0, %s24
      %s41 = sphi 0, %s25
      %s45 = sphi 0, %s45
      %s47 = sphi 0, %s45
      %s48 = sphi 0, %s47
      %s62 = sphi 0, %s48
      %s68 = sphi 0, %s70
      %s71 = sphi 0, %s68
      %s72 = sphi 0, %s71
      %s88 = sphi 0, %s72
    $region4: #{tpu_custom_call.1} parent=1 // loop_header_branch
      %14 = sbr.rel (%p12) target = $region8
    $region5: #{tpu_custom_call.1} parent=1 // loop_body
      %s16 = ssub.s32 %s11, 1
      %s17 = ssub.s32 %s11, 2
      %s18 = sadd.s32 %s11, 1
      %s19 = ssub.s32 %s11, %s18
      %p20 = scmp.eq.s32.totalorder %s19, 0
      %s22 = sadd.s32 %s21, 1
      %s23 = scalar_select %p20, %s21, %s22
      %p26 = pneg %p20
      %p27 = scmp.eq.s32.totalorder %s11, 1
      %p28 = por %p26, %p27
      %p29 = scmp.ne.s32.totalorder %s21, %s24
      %p30 = scmp.eq.s32.totalorder %s11, 0
      %p31 = por %p29, %p30
      %p32 = scmp.ne.s32.totalorder %s21, %s24
      %p33 = scmp.eq.s32.totalorder %s16, 1
      %p34 = por %p32, %p33
      %p35 = scmp.ne.s32.totalorder %s24, %s25
      %p36 = scmp.eq.s32.totalorder %s16, 0
      %p37 = por %p35, %p36
      %p38 = scmp.ne.s32.totalorder %s24, %s25
      %p39 = scmp.eq.s32.totalorder %s17, 1
      %p40 = por %p38, %p39
      %p42 = scmp.ne.s32.totalorder %s25, %s41
      %p43 = scmp.eq.s32.totalorder %s17, 0
      %p44 = por %p42, %p43
      %s46 = sadd.s32 %s45, 1
      %p49 = scmp.eq.s32.totalorder %s11, 1
      %p50 = scmp.ne.s32.totalorder %s45, %s47
      %p51 = scmp.eq.s32.totalorder %s11, 0
      %p52 = por %p50, %p51
      %p53 = scmp.ne.s32.totalorder %s45, %s47
      %p54 = scmp.eq.s32.totalorder %s16, 1
      %p55 = por %p53, %p54
      %p56 = scmp.ne.s32.totalorder %s47, %s48
      %p57 = scmp.eq.s32.totalorder %s16, 0
      %p58 = por %p56, %p57
      %p59 = scmp.ne.s32.totalorder %s47, %s48
      %p60 = scmp.eq.s32.totalorder %s17, 1
      %p61 = por %p59, %p60
      %p63 = scmp.ne.s32.totalorder %s48, %s62
      %p64 = scmp.eq.s32.totalorder %s17, 0
      %p65 = por %p63, %p64
      %s66 = ssub.s32 %s11, %s18
      %p67 = scmp.eq.s32.totalorder %s66, 0
      %s69 = sadd.s32 %s68, 1
      %s70 = scalar_select %p67, %s68, %s69
      %p73 = pneg %p67
      %p74 = scmp.eq.s32.totalorder %s11, 1
      %p75 = por %p73, %p74
      %p76 = scmp.ne.s32.totalorder %s68, %s71
      %p77 = scmp.eq.s32.totalorder %s11, 0
      %p78 = por %p76, %p77
      %p79 = scmp.ne.s32.totalorder %s68, %s71
      %p80 = scmp.eq.s32.totalorder %s16, 1
      %p81 = por %p79, %p80
      %p82 = scmp.ne.s32.totalorder %s71, %s72
      %p83 = scmp.eq.s32.totalorder %s16, 0
      %p84 = por %p82, %p83
      %p85 = scmp.ne.s32.totalorder %s71, %s72
      %p86 = scmp.eq.s32.totalorder %s17, 1
      %p87 = por %p85, %p86
      %p89 = scmp.ne.s32.totalorder %s72, %s88
      %p90 = scmp.eq.s32.totalorder %s17, 0
      %p91 = por %p89, %p90
      %p92 = scmp.le.s32.totalorder 1, %s11
      %p93 = scmp.lt.s32.totalorder %s11, 3
      %p94 = pnand %p92, %p93
      %p95 = pneg %p94
      // Predicated region
      $region9: #{tpu_custom_call.1} parent=5 // pred_check
        _
      $region10: #{tpu_custom_call.1} parent=5 // pred_check_branch
        %97 = sbr.rel (%p94) target = $region12
      $region11: #{tpu_custom_call.1} parent=5 // pred_region
        %s98 = ssub.s32 %s11, 1
        // Predicated region
        $region13: #{tpu_custom_call.1} parent=11 // pred_check
          %p99 = pneg %p58
        $region14: #{tpu_custom_call.1} parent=11 // pred_check_branch
          %101 = sbr.rel (%p99) target = $region16
        $region15: #{tpu_custom_call.1} parent=11 // pred_region
          _
        $region16: #{tpu_custom_call.1} parent=11 // pred_fallthru
          _
      $region12: #{tpu_custom_call.1} parent=5 // pred_fallthru
        _
      %p102 = scmp.lt.s32.totalorder %s11, 2
      // Predicated region
      $region17: #{tpu_custom_call.1} parent=5 // pred_check
        %p103 = pneg %p102
      $region18: #{tpu_custom_call.1} parent=5 // pred_check_branch
        %105 = sbr.rel (%p103) target = $region20
      $region19: #{tpu_custom_call.1} parent=5 // pred_region
        // Predicated region
        $region21: #{tpu_custom_call.1} parent=19 // pred_check
          %p106 = pneg %p31
        $region22: #{tpu_custom_call.1} parent=19 // pred_check_branch
          %108 = sbr.rel (%p106) target = $region24
        $region23: #{tpu_custom_call.1} parent=19 // pred_region
          %p109 = scmp.lt.s32.totalorder %s11, 1
          %s110 = scalar_select %p109, %s11, 1
          %s111 = smul.addr %s110, 2
          %s112 = smul.addr %s111, 4
          %s113 = scalar_lea.vmem %s0, %s112
        $region24: #{tpu_custom_call.1} parent=19 // pred_fallthru
          _
      $region20: #{tpu_custom_call.1} parent=5 // pred_fallthru
        _
      %p114 = scmp.le.s32.totalorder 1, %s11
      %p115 = scmp.lt.s32.totalorder %s11, 3
      %p116 = pnand %p114, %p115
      %p117 = pneg %p116
      // Predicated region
      $region25: #{tpu_custom_call.1} parent=5 // pred_check
        _
      $region26: #{tpu_custom_call.1} parent=5 // pred_check_branch
        %119 = sbr.rel (%p116) target = $region28
      $region27: #{tpu_custom_call.1} parent=5 // pred_region
        %s120 = ssub.s32 %s11, 1
        %p121 = scmp.lt.s32.totalorder %s16, 1
        %s122 = scalar_select %p121, %s16, 1
        %s123 = smul.addr %s122, 2
        %s124 = smul.addr %s123, 4
        %s125 = scalar_lea.vmem %s0, %s124
        %p126 = pneg %p37
        %p127 = pneg %p34
        %p128 = pneg %p58
        %p129 = pneg %p55
        %p130 = pneg %p84
        %p131 = pneg %p81
        %s132 = sand.u32 %s71, 1
        %s133 = scalar_lea.sflag [#allocation3], %s132
        %s134 = sand.u32 %s71, 1
        %s135 = scalar_lea.vmem [#allocation2], %s134
        %p136 = scmp.lt.s32.totalorder %s16, 1
        %s137 = scalar_select %p136, %s16, 1
        %s138 = smul.addr %s137, 2
        %s139 = smul.addr %s138, 4
        %s140 = scalar_lea.vmem %s0, %s139
        %v142 = vld [vmem:[%s1] sm:$0xff]
        %v143 = vld [vmem:[%s1 + $0x8] sm:$0xff]
        %v144 = vld [vmem:[%s140] sm:$0xf]
        %v145 = vld [vmem:[%s140 + $0x4] sm:$0xf]
        %v148 = vunpack.c.l.b16 %v144
        %v149 = vunpack.c.l.b16 %v145
        %v150 = vpack.c.b16 %v149, %v148
        %152 = vxpose.xlu0.c.b16.start [1/8] %v150, 128
        %153 = vxpose.xlu0.c.b16.cont [2/8] 0, 128
        %154 = vxpose.xlu0.c.b16.cont [3/8] 0, 128
        %155 = vxpose.xlu0.c.b16.cont [4/8] 0, 128
        %156 = vxpose.xlu0.c.b16.cont [5/8] 0, 128
        %157 = vxpose.xlu0.c.b16.cont [6/8] 0, 128
        %158 = vxpose.xlu0.c.b16.cont [7/8] 0, 128
        %159 = vxpose.xlu0.c.b16.end [8/8] 0, 128
        %v160 = vpop.trf.xlu0
        %v161 = vpop.trf.xlu0
        %v162 = vpop.trf.xlu0
        %v163 = vpop.trf.xlu0
        %v164 = vpop.trf.xlu0
        %v165 = vpop.trf.xlu0
        %v166 = vpop.trf.xlu0
        %v167 = vpop.trf.xlu0
        %v170 = vunpack.c.l.b16 %v142
        %v171 = vunpack.c.h.b16 %v142
        %v172 = vunpack.c.l.b16 %v143
        %v173 = vunpack.c.h.b16 %v143
        %v174 = vpack.c.b16 %v172, %v170
        %v175 = vpack.c.b16 %v173, %v171
        %vm178 = vcmask 130048
        %v180 = vsel %vm178, %v160, 0
        %182 = vmatprep.subr.bf16.mxu0 %v175
        %183 = vmatpush1.bf16.msra.mxu0 %v174
        %184 = vmatprep.subr.bf16.mxu0 0
        %185 = vmatpush1.bf16.msra.mxu0 0
        %186 = vmatprep.subr.bf16.mxu0 0
        %187 = vmatpush1.bf16.msra.mxu0 0
        %188 = vmatprep.subr.bf16.mxu0 0
        %189 = vmatpush1.bf16.msra.mxu0 0
        %190 = vmatprep.subr.bf16.mxu0 0
        %191 = vmatpush1.bf16.msra.mxu0 0
        %192 = vmatprep.subr.bf16.mxu0 0
        %193 = vmatpush1.bf16.msra.mxu0 0
        %194 = vmatprep.subr.bf16.mxu0 0
        %195 = vmatpush1.bf16.msra.mxu0 0
        %196 = vmatprep.subr.bf16.mxu0 0
        %197 = vmatpush1.bf16.msra.mxu0 0
        %198 = vmatprep.subr.bf16.mxu0 0
        %199 = vmatpush1.bf16.msra.mxu0 0
        %200 = vmatprep.subr.bf16.mxu0 0
        %201 = vmatpush1.bf16.msra.mxu0 0
        %202 = vmatprep.subr.bf16.mxu0 0
        %203 = vmatpush1.bf16.msra.mxu0 0
        %204 = vmatprep.subr.bf16.mxu0 0
        %205 = vmatpush1.bf16.msra.mxu0 0
        %206 = vmatprep.subr.bf16.mxu0 0
        %207 = vmatpush1.bf16.msra.mxu0 0
        %208 = vmatprep.subr.bf16.mxu0 0
        %209 = vmatpush1.bf16.msra.mxu0 0
        %210 = vmatprep.subr.bf16.mxu0 0
        %211 = vmatpush1.bf16.msra.mxu0 0
        %212 = vmatprep.subr.bf16.mxu0 0
        %213 = vmatpush1.bf16.msra.mxu0 0
        %214 = vmatprep.mubr.bf16.mxu0 0
        %215 = vmatmul.mubr.bf16.gmra.mrb[0].mxu0 %v180
        %v216 = vpop.f32.mrb[0].mxu0
        %v217 = vadd.f32 0.0, %v216
        %v218 = vpop.f32.mrb[0].mxu0
        %v219 = vadd.f32 0.0, %v218
        %v220 = vpop.f32.mrb[0].mxu0
        %v221 = vpop.f32.mrb[0].mxu0
        %222 = vdwg.mxu0
        %v223 = vmul.f32 %v217, %v217
        %v224 = vmul.f32 %v219, %v219
        %v225 = vadd.f32 %v223, %v224
        %v226 = vrsqrt.pop %v225
        %v227 = vmul.f32 %v225, %v226
        %vm228 = vcmp.eq.f32.partialorder %v225, inf
        %v229 = vsel %vm228, %v225, %v227
        %vm230 = vcmp.eq.f32.partialorder %v225, 0.0
        %v231 = vand.u32 %v225, 2147483648
        %v232 = vsel %vm230, %v231, %v229
        %vm233 = vcmask 1043456
        %v234 = vsel %vm233, %v232, 0.0
        %v235 = vrot.slane %v234, 4
        %v236 = vadd.f32 %v234, %v235
        %v237 = vrot.slane %v236, 2
        %v238 = vadd.f32 %v236, %v237
        %v239 = vrot.slane %v238, 1
        %v240 = vadd.f32 %v238, %v239
        %v241 = vmul.f32 %v240, 0.25
        %242 = vst [vmem:[%s135] sm:$0x1] %v241
        %s243 = sand.u32 %s71, 1
        %s244 = scalar_lea.sflag [#allocation3], %s243
        %s245 = sand.u32 %s71, 1
        %s246 = scalar_lea.vmem [#allocation2], %s245
        // Predicated region
        $region29: #{tpu_custom_call.1} parent=27 // pred_check
          %p247 = pneg %p81
        $region30: #{tpu_custom_call.1} parent=27 // pred_check_branch
          %249 = sbr.rel (%p247) target = $region32
        $region31: #{tpu_custom_call.1} parent=27 // pred_region
          %s251 = ssub.s32 16, 16
          %252 = vsyncadd %s244, %s251
          %s253 = smul.addr %s16, 16
          %s254 = scalar_lea.hbm %s2, %s253
          %s256 = sshll.u32 %s246, 4
          %s257 = int_to_ptr.vmem [resolvable:$true] %s256
          %259 = dma.vmem_to_hbm [thread:$0]  %s257, 16, %s254, %s244
        $region32: #{tpu_custom_call.1} parent=27 // pred_fallthru
          _
      $region28: #{tpu_custom_call.1} parent=5 // pred_fallthru
        _
      %p260 = scmp.le.s32.totalorder 2, %s11
      // Predicated region
      $region33: #{tpu_custom_call.1} parent=5 // pred_check
        %p261 = pneg %p260
      $region34: #{tpu_custom_call.1} parent=5 // pred_check_branch
        %263 = sbr.rel (%p261) target = $region36
      $region35: #{tpu_custom_call.1} parent=5 // pred_region
        %s264 = ssub.s32 %s11, 2
        // Predicated region
        $region37: #{tpu_custom_call.1} parent=35 // pred_check
          %p265 = pneg %p87
        $region38: #{tpu_custom_call.1} parent=35 // pred_check_branch
          %267 = sbr.rel (%p265) target = $region40
        $region39: #{tpu_custom_call.1} parent=35 // pred_region
          %s268 = sand.u32 %s72, 1
          %s269 = scalar_lea.sflag [#allocation3], %s268
          %s270 = sand.u32 %s72, 1
          %s271 = scalar_lea.vmem [#allocation2], %s270
          %272 = dma.done %s269, 16
        $region40: #{tpu_custom_call.1} parent=35 // pred_fallthru
          _
      $region36: #{tpu_custom_call.1} parent=5 // pred_fallthru
        _
    $region6: #{tpu_custom_call.1} parent=1 // loop_footer
      %s15 = sadd.s32 1, %s11
    $region7: #{tpu_custom_call.1} parent=1 // loop_footer_branch
      %10 = sbr.rel target = $region3
    $region8: #{tpu_custom_call.1} parent=1 // loop_exit
      _
    %273 = vsyncpa [#allocation3], 1
    %s274 = scalar_lea.sflag [#allocation3], 1
    %275 = vsyncpa %s274, 1

</llo_original>
